<compile_context>
chip_gen: v7x
topology: tpu7x:2x2x1
jax: 0.10.0
libtpu: 0.0.40
codegen_flags: <defaults>
</compile_context>

<pallas_src>
import functools

import jax
import jax.numpy as jnp
from jax.experimental import pallas as pl
from jax.experimental.pallas import tpu as pltpu


# ---------------------------------------------------------------------------
# Kernels
# ---------------------------------------------------------------------------

def _logits_kernel(idx_ref, emb_ref, logits_ref):
    """Embedding gather as one-hot @ table. No cross-entropy work."""
    tile = logits_ref.shape[0]
    V = emb_ref.shape[0]
    lane = jax.lax.broadcasted_iota(jnp.int32, (tile, V), 1)
    one_hot = (lane == idx_ref[...]).astype(jnp.float32)           # (tile, V)
    logits_ref[...] = jnp.dot(one_hot, emb_ref[...],
                              preferred_element_type=jnp.float32)


def _ce_rows(lane, logits, tgt):
    """Per-row cross entropy; padded rows (tgt < 0) contribute exactly 0."""
    m = jnp.max(logits, axis=-1, keepdims=True)
    lse = m + jnp.log(jnp.sum(jnp.exp(logits - m), axis=-1, keepdims=True))
    # Avoid materializing a full (tile, V) target one-hot temporary.
    correct = jnp.sum(jnp.where(lane == tgt, logits, 0.0),
                      axis=-1, keepdims=True)
    return jnp.where(tgt >= 0, lse - correct, 0.0)                  # (tile, 1)


def _logits_loss_kernel(idx_ref, tgt_ref, emb_ref, logits_ref, loss_ref):
    tile = logits_ref.shape[0]
    V = emb_ref.shape[0]
    lane = jax.lax.broadcasted_iota(jnp.int32, (tile, V), 1)
    one_hot = (lane == idx_ref[...]).astype(jnp.float32)
    logits = jnp.dot(one_hot, emb_ref[...], preferred_element_type=jnp.float32)
    logits_ref[...] = logits
    loss_ref[...] = _ce_rows(lane, logits, tgt_ref[...])


def _loss_only_kernel(idx_ref, tgt_ref, emb_ref, loss_ref):
    """Scalar CE-sum accumulator; never writes the (BT, V) logits to HBM."""
    tile = idx_ref.shape[0]
    V = emb_ref.shape[0]

    @pl.when(pl.program_id(0) == 0)
    def _():
        loss_ref[...] = jnp.zeros_like(loss_ref)

    lane = jax.lax.broadcasted_iota(jnp.int32, (tile, V), 1)
    one_hot = (lane == idx_ref[...]).astype(jnp.float32)
    logits = jnp.dot(one_hot, emb_ref[...], preferred_element_type=jnp.float32)
    per_row = _ce_rows(lane, logits, tgt_ref[...])                  # (tile, 1)
    loss_ref[...] += jnp.sum(per_row, axis=0, keepdims=True)        # (1, 1)


# ---------------------------------------------------------------------------
# pallas_call wrappers
# ---------------------------------------------------------------------------

def _common_specs(tile, V):
    idx_spec = pl.BlockSpec((tile, 1), lambda i: (i, 0))
    # Constant block index -> the table is DMA'd once and stays VMEM-resident.
    # At V=128 the (default) double-buffered footprint is only 2*64 KB; for V
    # large enough that the table footprint / V*V HBM read matters, switch to
    # a scalar-prefetch row gather (PrefetchScalarGridSpec + pl.Element on emb)
    # instead of keeping the table resident.
    emb_spec = pl.BlockSpec((V, V), lambda i: (0, 0))
    return idx_spec, emb_spec


@functools.partial(jax.jit, static_argnames=("tile",))
def _logits_pallas(idx2, emb, *, tile):
    BT_pad = idx2.shape[0]
    V = emb.shape[0]
    idx_spec, emb_spec = _common_specs(tile, V)
    return pl.pallas_call(
        _logits_kernel,
        out_shape=jax.ShapeDtypeStruct((BT_pad, V), jnp.float32),
        grid_spec=pltpu.PrefetchScalarGridSpec(
            num_scalar_prefetch=0,
            grid=(BT_pad // tile,),
            in_specs=[idx_spec, emb_spec],
            out_specs=pl.BlockSpec((tile, V), lambda i: (i, 0)),
        ),
        compiler_params=pltpu.CompilerParams(
            dimension_semantics=("parallel",)),
    )(idx2, emb)


@functools.partial(jax.jit, static_argnames=("tile",))
def _logits_loss_pallas(idx2, tgt2, emb, *, tile):
    BT_pad = idx2.shape[0]
    V = emb.shape[0]
    idx_spec, emb_spec = _common_specs(tile, V)
    return pl.pallas_call(
        _logits_loss_kernel,
        out_shape=(
            jax.ShapeDtypeStruct((BT_pad, V), jnp.float32),
            jax.ShapeDtypeStruct((BT_pad, 1), jnp.float32),
        ),
        grid_spec=pltpu.PrefetchScalarGridSpec(
            num_scalar_prefetch=0,
            grid=(BT_pad // tile,),
            in_specs=[idx_spec, idx_spec, emb_spec],
            out_specs=[
                pl.BlockSpec((tile, V), lambda i: (i, 0)),   # lane-dense logits
                pl.BlockSpec((tile, 1), lambda i: (i, 0)),   # per-row CE
            ],
        ),
        compiler_params=pltpu.CompilerParams(
            dimension_semantics=("parallel",)),
    )(idx2, tgt2, emb)


@functools.partial(jax.jit, static_argnames=("tile",))
def _loss_only_pallas(idx2, tgt2, emb, *, tile):
    BT_pad = idx2.shape[0]
    V = emb.shape[0]
    idx_spec, emb_spec = _common_specs(tile, V)
    return pl.pallas_call(
        _loss_only_kernel,
        out_shape=jax.ShapeDtypeStruct((1, 1), jnp.float32),
        grid_spec=pltpu.PrefetchScalarGridSpec(
            num_scalar_prefetch=0,
            grid=(BT_pad // tile,),
            in_specs=[idx_spec, idx_spec, emb_spec],
            # Accumulator: same (1, 1) block for every grid step.
            out_specs=pl.BlockSpec((1, 1), lambda i: (0, 0)),
        ),
        compiler_params=pltpu.CompilerParams(
            dimension_semantics=("arbitrary",)),
    )(idx2, tgt2, emb)


# ---------------------------------------------------------------------------
# Python wrappers (padding / masking / reshapes)
# ---------------------------------------------------------------------------

def _round_up(n, m):
    return ((n + m - 1) // m) * m


def _pad_rows(x, rows, fill):
    pad = rows - x.shape[0]
    if pad == 0:
        return x
    filler = jnp.full((pad,) + x.shape[1:], fill, x.dtype)
    return jnp.concatenate([x, filler], axis=0)


def _prep(idx, targets, tile):
    B, T = idx.shape
    BT = B * T
    # 128-512 row tiles (multiple of 8) are the perf sweet spot; clamp so tiny
    # inputs are not padded up to a whole 256-row block. For big BT the grid
    # has >= 2 steps, so the "parallel" axis can shard across v7x's 2 cores.
    tile = max(8, min(tile, _round_up(BT, 8)))
    BT_pad = _round_up(BT, tile)
    idx2 = _pad_rows(idx.reshape(BT, 1).astype(jnp.int32), BT_pad, 0)
    tgt2 = None
    if targets is not None:
        # -1 marks padded rows; they are masked out of the loss in-kernel.
        tgt2 = _pad_rows(targets.reshape(BT, 1).astype(jnp.int32), BT_pad, -1)
    return idx2, tgt2, tile, BT


def bigram_forward(idx, emb, targets=None, *, tile=256):
    """Mirror of BigramLM.forward.

    idx:     (B, T) int token ids in [0, V)
    emb:     (V, V) float32 embedding table
    targets: optional (B, T) int token ids
    Returns (logits, loss):
      targets is None -> logits (B, T, V), loss None
      else            -> logits (B*T, V),  loss scalar (mean CE over B*T rows)
    """
    B, T = idx.shape
    V = emb.shape[0]
    idx2, tgt2, tile, BT = _prep(idx, targets, tile)

    if targets is None:
        logits = _logits_pallas(idx2, emb, tile=tile)[:BT]
        return logits.reshape(B, T, V), None

    logits, per_row = _logits_loss_pallas(idx2, tgt2, emb, tile=tile)
    loss = jnp.sum(per_row) / BT          # padded rows contribute exactly 0
    return logits[:BT], loss


def bigram_loss(idx, emb, targets, *, tile=256):
    """Training-step helper: scalar mean CE without writing logits to HBM."""
    idx2, tgt2, tile, BT = _prep(idx, targets, tile)
    total = _loss_only_pallas(idx2, tgt2, emb, tile=tile)
    return total[0, 0] / BT


# TODO(synk): generate()'s autoregressive torch.multinomial sampling loop is
# host-side control flow and is not implemented as a kernel.


if __name__ == "__main__":
    key = jax.random.PRNGKey(0)
    k_emb, k_idx, k_tgt, k_idx2, k_tgt2 = jax.random.split(key, 5)

    V = 128          # vocab_len
    B, T = 2, 8

    # nn.Embedding default init ~ N(0, 1)
    emb = jax.random.normal(k_emb, (V, V), dtype=jnp.float32)
    idx = jax.random.randint(k_idx, (B, T), 0, V, dtype=jnp.int32)
    targets = jax.random.randint(k_tgt, (B, T), 0, V, dtype=jnp.int32)

    def ref_forward(idx_a, emb_a, tgt_a):
        lg = emb_a[idx_a.reshape(-1)]
        lse = jax.nn.logsumexp(lg, axis=-1)
        correct = lg[jnp.arange(lg.shape[0]), tgt_a.reshape(-1)]
        return lg, jnp.mean(lse - correct)

    # 1) targets given: (B*T, V) logits + scalar mean CE.
    logits, loss = bigram_forward(idx, emb, targets)
    jax.block_until_ready((logits, loss))
    ref_logits, ref_loss = ref_forward(idx, emb, targets)
    assert logits.shape == (B * T, V)
    assert jnp.allclose(logits, ref_logits, atol=1e-5)
    assert jnp.allclose(loss, ref_loss, atol=1e-5)

    # 2) targets=None: (B, T, V) logits, loss None, CE work (and tgt DMA) skipped.
    logits_nt, loss_nt = bigram_forward(idx, emb, None)
    jax.block_until_ready(logits_nt)
    assert loss_nt is None
    assert logits_nt.shape == (B, T, V)
    assert jnp.allclose(logits_nt.reshape(B * T, V), ref_logits, atol=1e-5)

    # 3) loss-only path (no logits HBM writeback) matches.
    loss_only = bigram_loss(idx, emb, targets)
    jax.block_until_ready(loss_only)
    assert jnp.allclose(loss_only, ref_loss, atol=1e-5)

    # 4) shapes exercising tail masking (BT=21 -> padded to 24) and a
    #    multi-step grid (BT=1024 with tile=256 -> 4 grid steps).
    for (Bx, Tx) in [(3, 7), (4, 256)]:
        idx_x = jax.random.randint(k_idx2, (Bx, Tx), 0, V, dtype=jnp.int32)
        tgt_x = jax.random.randint(k_tgt2, (Bx, Tx), 0, V, dtype=jnp.int32)
        lg_x, ls_x = bigram_forward(idx_x, emb, tgt_x)
        jax.block_until_ready((lg_x, ls_x))
        ref_lg_x, ref_ls_x = ref_forward(idx_x, emb, tgt_x)
        assert lg_x.shape == (Bx * Tx, V)
        assert jnp.allclose(lg_x, ref_lg_x, atol=1e-5)
        assert jnp.allclose(ls_x, ref_ls_x, atol=1e-5)
        ls_only_x = bigram_loss(idx_x, emb, tgt_x)
        assert jnp.allclose(ls_only_x, ref_ls_x, atol=1e-5)

    print("KERNEL_OK")
</pallas_src>

<mosaic_0001>
module attributes {stable_mosaic.version = 11 : i64} {
  func.func @_logits_loss_kernel(%arg0: i32, %arg1: memref<16x1xi32, #tpu.memory_space<vmem>>, %arg2: memref<16x1xi32, #tpu.memory_space<vmem>>, %arg3: memref<128x128xf32, #tpu.memory_space<vmem>>, %arg4: memref<16x128xf32, #tpu.memory_space<vmem>>, %arg5: memref<16x1xf32, #tpu.memory_space<vmem>>) attributes {dimension_semantics = [#tpu.dimension_semantics<parallel>], iteration_bounds = array<i64: 1>, scalar_prefetch = 0 : i64, scratch_operands = 0 : i64, tpu.core_type = #tpu.core_type<tc>, window_params = [{transform_indices = @transform_0, window_bounds = array<i64: 16, 1>}, {transform_indices = @transform_1, window_bounds = array<i64: 16, 1>}, {pipeline_mode = #tpu.pipeline_mode<synchronous>, transform_indices = @transform_2, window_bounds = array<i64: 128, 128>}, {transform_indices = @transform_3, window_bounds = array<i64: 16, 128>}, {transform_indices = @transform_4, window_bounds = array<i64: 16, 1>}]} {
    %0 = tpu.iota {dimensions = array<i32: 1>} : vector<16x128xi32>
    %c0 = arith.constant 0 : index
    %c0_0 = arith.constant 0 : index
    %1 = vector.load %arg1[%c0, %c0_0] : memref<16x1xi32, #tpu.memory_space<vmem>>, vector<16x1xi32>
    %2 = vector.broadcast %1 : vector<16x1xi32> to vector<16x128xi32>
    %3 = arith.cmpi eq, %0, %2 : vector<16x128xi32>
    %4 = arith.extui %3 : vector<16x128xi1> to vector<16x128xi32>
    %5 = arith.sitofp %4 : vector<16x128xi32> to vector<16x128xf32>
    %c0_1 = arith.constant 0 : index
    %c0_2 = arith.constant 0 : index
    %6 = vector.load %arg3[%c0_1, %c0_2] : memref<128x128xf32, #tpu.memory_space<vmem>>, vector<128x128xf32>
    %cst = arith.constant dense<0.000000e+00> : vector<16x128xf32>
    %7 = tpu.matmul %5, %6, %cst {dimension_numbers = #tpu.dot_dimension_numbers<[1], [0], [0], [1], [0, 0, 1, 1], [], []>} : vector<16x128xf32>, vector<128x128xf32>, vector<16x128xf32> -> vector<16x128xf32>
    %c0_3 = arith.constant 0 : index
    %c0_4 = arith.constant 0 : index
    %8 = vector.load %arg4[%c0_3, %c0_4] : memref<16x128xf32, #tpu.memory_space<vmem>>, vector<16x128xf32>
    tpu.vector_store %arg4[%c0_3, %c0_4], %7 {strides = array<i32>} : memref<16x128xf32, #tpu.memory_space<vmem>>, vector<16x128xf32>,
    %c0_5 = arith.constant 0 : index
    %c0_6 = arith.constant 0 : index
    %9 = vector.load %arg2[%c0_5, %c0_6] : memref<16x1xi32, #tpu.memory_space<vmem>>, vector<16x1xi32>
    %cst_7 = arith.constant dense<0xFF800000> : vector<16xf32>
    %10 = vector.multi_reduction <maximumf>, %7, %cst_7 [1] : vector<16x128xf32> to vector<16xf32>
    %11 = vector.shape_cast %10 : vector<16xf32> to vector<16x1xf32>
    %12 = vector.broadcast %11 : vector<16x1xf32> to vector<16x128xf32>
    %13 = arith.subf %7, %12 : vector<16x128xf32>
    %14 = math.exp %13 : vector<16x128xf32>
    %cst_8 = arith.constant dense<0.000000e+00> : vector<16xf32>
    %15 = vector.multi_reduction <add>, %14, %cst_8 [1] : vector<16x128xf32> to vector<16xf32>
    %16 = vector.shape_cast %15 : vector<16xf32> to vector<16x1xf32>
    %17 = math.log %16 : vector<16x1xf32>
    %18 = arith.addf %11, %17 : vector<16x1xf32>
    %19 = vector.broadcast %9 : vector<16x1xi32> to vector<16x128xi32>
    %20 = arith.cmpi eq, %0, %19 : vector<16x128xi32>
    %cst_9 = arith.constant 0.000000e+00 : f32
    %21 = vector.broadcast %cst_9 : f32 to vector<16x128xf32>
    %22 = arith.select %20, %7, %21 : vector<16x128xi1>, vector<16x128xf32>
    %cst_10 = arith.constant dense<0.000000e+00> : vector<16xf32>
    %23 = vector.multi_reduction <add>, %22, %cst_10 [1] : vector<16x128xf32> to vector<16xf32>
    %24 = vector.shape_cast %23 : vector<16xf32> to vector<16x1xf32>
    %c0_i32 = arith.constant 0 : i32
    %25 = vector.broadcast %c0_i32 : i32 to vector<16x1xi32>
    %26 = arith.cmpi sge, %9, %25 : vector<16x1xi32>
    %27 = arith.subf %18, %24 : vector<16x1xf32>
    %cst_11 = arith.constant 0.000000e+00 : f32
    %28 = vector.broadcast %cst_11 : f32 to vector<16x1xf32>
    %29 = arith.select %26, %27, %28 : vector<16x1xi1>, vector<16x1xf32>
    %c0_12 = arith.constant 0 : index
    %c0_13 = arith.constant 0 : index
    %30 = vector.load %arg5[%c0_12, %c0_13] : memref<16x1xf32, #tpu.memory_space<vmem>>, vector<16x1xf32>
    tpu.vector_store %arg5[%c0_12, %c0_13], %29 {strides = array<i32>} : memref<16x1xf32, #tpu.memory_space<vmem>>, vector<16x1xf32>,
    return
  }
  func.func @transform_0(%arg0: i32) -> (i32, i32) {
    %c0_i32 = arith.constant 0 : i32
    %c0_i32_0 = arith.constant 0 : i32
    return %arg0, %c0_i32 : i32, i32
  }
  func.func @transform_1(%arg0: i32) -> (i32, i32) {
    %c0_i32 = arith.constant 0 : i32
    %c0_i32_0 = arith.constant 0 : i32
    return %arg0, %c0_i32 : i32, i32
  }
  func.func @transform_2(%arg0: i32) -> (i32, i32) {
    %c0_i32 = arith.constant 0 : i32
    %c0_i32_0 = arith.constant 0 : i32
    %c0_i32_1 = arith.constant 0 : i32
    return %c0_i32, %c0_i32_0 : i32, i32
  }
  func.func @transform_3(%arg0: i32) -> (i32, i32) {
    %c0_i32 = arith.constant 0 : i32
    %c0_i32_0 = arith.constant 0 : i32
    return %arg0, %c0_i32 : i32, i32
  }
  func.func @transform_4(%arg0: i32) -> (i32, i32) {
    %c0_i32 = arith.constant 0 : i32
    %c0_i32_0 = arith.constant 0 : i32
    return %arg0, %c0_i32 : i32, i32
  }
}

</mosaic_0001>

<llo_original>
// kernel: _logits_loss_pallas.1
$region0: #{_logits_loss_pallas.1}
  #allocation0 [shape = 'u32[]', space=smem, size = 0x4, offset = 0x4, fixed_abs, tag = 'smem constant byte address 0x4 - core index']
  #allocation1 [shape = 'u32[144,128]{1,0:T(1,128)}', space=vmem, size = 0x12000, scoped, tag = 'internal scratch']
  %s0 = inlined_call_operand.vmem [shape: s32[16,1], index: 0, kind: input, shape index: {}]
  %s1 = inlined_call_operand.vmem [shape: s32[16,1], index: 1, kind: input, shape index: {}]
  %s2 = inlined_call_operand.hbm [shape: f32[128,128], index: 2, kind: input, shape index: {}]
  %s3 = inlined_call_operand.hbm [shape: f32[16,128], index: 3, kind: output, shape index: {0}]
  %s4 = inlined_call_operand.vmem [shape: f32[16,1], index: 4, kind: output, shape index: {1}]
  %5 = xla_tuple %s3, %s4
  %s6 = sld [smem:[#allocation0]]
  $region34: #{_logits_loss_pallas.1} parent=0
    _
  %s8 = ssub.s32 1, %s6
  %s9 = scalar_select 0, %s8, %s6
  $region1: #{_logits_loss_pallas.1} parent=0
    #allocation2 [shape = 'u8[65536]{0}', space=vmem, size = 0x10000, scoped, tag = 'input window, operand 2, single buffered']
    #allocation3 [shape = 's32[1]{0}', space=sflag, size = 0x4, scoped, tag = 'scoped memory for _logits_loss_pallas.1']
    #allocation4 [shape = 's32[1]{0}', space=sflag, size = 0x4, scoped, tag = 'scoped memory for _logits_loss_pallas.1']
    #allocation5 [shape = 'u8[8192]{0}', space=vmem, size = 0x2000, scoped, tag = 'output window, operand 0, single buffered']
    %10 = vsyncpa [#allocation3], 0
    %11 = vsyncpa [#allocation4], 0
    // Predicated region
    $region2: #{_logits_loss_pallas.1} parent=1 // pred_check
      _
    $region3: #{_logits_loss_pallas.1} parent=1 // pred_check_branch
      %13 = sbr.rel (0) target = $region5
    $region4: #{_logits_loss_pallas.1} parent=1 // pred_region
      _
    $region5: #{_logits_loss_pallas.1} parent=1 // pred_fallthru
      _
    // Predicated region
    $region6: #{_logits_loss_pallas.1} parent=1 // pred_check
      _
    $region7: #{_logits_loss_pallas.1} parent=1 // pred_check_branch
      %15 = sbr.rel (0) target = $region9
    $region8: #{_logits_loss_pallas.1} parent=1 // pred_region
      _
    $region9: #{_logits_loss_pallas.1} parent=1 // pred_fallthru
      _
    // Predicated region
    $region10: #{_logits_loss_pallas.1} parent=1 // pred_check
      _
    $region11: #{_logits_loss_pallas.1} parent=1 // pred_check_branch
      %17 = sbr.rel (0) target = $region13
    $region12: #{_logits_loss_pallas.1} parent=1 // pred_region
      %s19 = ssub.s32 2048, 2048
      %20 = vsyncadd [#allocation3], %s19
      %s21 = sshll.u32 [#allocation2], 4
      %s22 = int_to_ptr.vmem [resolvable:$true] %s21
      %27 = dma.hbm_to_vmem [thread:$0]  %s2, 2048, %s22, [#allocation3], 128, 128, 8
    $region13: #{_logits_loss_pallas.1} parent=1 // pred_fallthru
      _
    // Predicated region
    $region14: #{_logits_loss_pallas.1} parent=1 // pred_check
      _
    $region15: #{_logits_loss_pallas.1} parent=1 // pred_check_branch
      %29 = sbr.rel (0) target = $region17
    $region16: #{_logits_loss_pallas.1} parent=1 // pred_region
      %30 = dma.done [#allocation3], 2048
    $region17: #{_logits_loss_pallas.1} parent=1 // pred_fallthru
      _
    %v31 = vlaneseq
    %v32 = vand.u32 %v31, 127
    %v33 = vld [vmem:[%s0] sm:$0xff]
    %v34 = vld [vmem:[%s0 + $0x8] sm:$0xff]
    %35 = vset.pattern.permute.xlu0 0
    %36 = vperm.xlu0 %35, %v33
    %v37 = vpop.permute.xlu0 %36
    %38 = vset.pattern.permute.xlu0 0
    %39 = vperm.xlu0 %38, %v34
    %v40 = vpop.permute.xlu0 %39
    %vm41 = vcmp.eq.s32.totalorder %v32, %v37
    %vm42 = vcmp.eq.s32.totalorder %v32, %v40
    %v43 = vsel %vm41, 1, 0
    %v44 = vsel %vm42, 1, 0
    %v45 = vcvt.s32.f32 %v43
    %v46 = vcvt.s32.f32 %v44
    %v47 = vld [vmem:[#allocation2] sm:$0xff]
    %v48 = vld [vmem:[#allocation2 + $0x8] sm:$0xff]
    %v49 = vld [vmem:[#allocation2 + $0x10] sm:$0xff]
    %v50 = vld [vmem:[#allocation2 + $0x18] sm:$0xff]
    %v51 = vld [vmem:[#allocation2 + $0x20] sm:$0xff]
    %v52 = vld [vmem:[#allocation2 + $0x28] sm:$0xff]
    %v53 = vld [vmem:[#allocation2 + $0x30] sm:$0xff]
    %v54 = vld [vmem:[#allocation2 + $0x38] sm:$0xff]
    %v55 = vld [vmem:[#allocation2 + $0x40] sm:$0xff]
    %v56 = vld [vmem:[#allocation2 + $0x48] sm:$0xff]
    %v57 = vld [vmem:[#allocation2 + $0x50] sm:$0xff]
    %v58 = vld [vmem:[#allocation2 + $0x58] sm:$0xff]
    %v59 = vld [vmem:[#allocation2 + $0x60] sm:$0xff]
    %v60 = vld [vmem:[#allocation2 + $0x68] sm:$0xff]
    %v61 = vld [vmem:[#allocation2 + $0x70] sm:$0xff]
    %v62 = vld [vmem:[#allocation2 + $0x78] sm:$0xff]
    %63 = vmatprep.subr.mxu0 0.0
    %64 = vmatpush1.msra.mxu0 %v47
    %65 = vmatprep.subr.mxu0 0.0
    %66 = vmatpush1.msra.mxu0 %v48
    %67 = vmatprep.subr.mxu0 0.0
    %68 = vmatpush1.msra.mxu0 %v49
    %69 = vmatprep.subr.mxu0 0.0
    %70 = vmatpush1.msra.mxu0 %v50
    %71 = vmatprep.subr.mxu0 0.0
    %72 = vmatpush1.msra.mxu0 %v51
    %73 = vmatprep.subr.mxu0 0.0
    %74 = vmatpush1.msra.mxu0 %v52
    %75 = vmatprep.subr.mxu0 0.0
    %76 = vmatpush1.msra.mxu0 %v53
    %77 = vmatprep.subr.mxu0 0.0
    %78 = vmatpush1.msra.mxu0 %v54
    %79 = vmatprep.subr.mxu0 0.0
    %80 = vmatpush1.msra.mxu0 %v55
    %81 = vmatprep.subr.mxu0 0.0
    %82 = vmatpush1.msra.mxu0 %v56
    %83 = vmatprep.subr.mxu0 0.0
    %84 = vmatpush1.msra.mxu0 %v57
    %85 = vmatprep.subr.mxu0 0.0
    %86 = vmatpush1.msra.mxu0 %v58
    %87 = vmatprep.subr.mxu0 0.0
    %88 = vmatpush1.msra.mxu0 %v59
    %89 = vmatprep.subr.mxu0 0.0
    %90 = vmatpush1.msra.mxu0 %v60
    %91 = vmatprep.subr.mxu0 0.0
    %92 = vmatpush1.msra.mxu0 %v61
    %93 = vmatprep.subr.mxu0 0.0
    %94 = vmatpush1.msra.mxu0 %v62
    %95 = vmatprep.subr.mxu0 0.0
    %96 = vmatpush1.msra.mxu0 0.0
    %97 = vmatprep.subr.mxu0 0.0
    %98 = vmatpush1.msra.mxu0 0.0
    %99 = vmatprep.subr.mxu0 0.0
    %100 = vmatpush1.msra.mxu0 0.0
    %101 = vmatprep.subr.mxu0 0.0
    %102 = vmatpush1.msra.mxu0 0.0
    %103 = vmatprep.subr.mxu0 0.0
    %104 = vmatpush1.msra.mxu0 0.0
    %105 = vmatprep.subr.mxu0 0.0
    %106 = vmatpush1.msra.mxu0 0.0
    %107 = vmatprep.subr.mxu0 0.0
    %108 = vmatpush1.msra.mxu0 0.0
    %109 = vmatprep.subr.mxu0 0.0
    %110 = vmatpush1.msra.mxu0 0.0
    %111 = vmatprep.subr.mxu0 0.0
    %112 = vmatpush1.msra.mxu0 0.0
    %113 = vmatprep.subr.mxu0 0.0
    %114 = vmatpush1.msra.mxu0 0.0
    %115 = vmatprep.subr.mxu0 0.0
    %116 = vmatpush1.msra.mxu0 0.0
    %117 = vmatprep.subr.mxu0 0.0
    %118 = vmatpush1.msra.mxu0 0.0
    %119 = vmatprep.subr.mxu0 0.0
    %120 = vmatpush1.msra.mxu0 0.0
    %121 = vmatprep.subr.mxu0 0.0
    %122 = vmatpush1.msra.mxu0 0.0
    %123 = vmatprep.subr.mxu0 0.0
    %124 = vmatpush1.msra.mxu0 0.0
    %125 = vmatprep.subr.mxu0 0.0
    %126 = vmatpush1.msra.mxu0 0.0
    %127 = vmatprep.mubr.f32.mxu0 0.0
    %128 = vmatmul.mubr.f32.gmra.mrb[0].mxu0 %v45
    %v129 = vpop.f32.mrb[0].mxu0
    %v130 = vadd.f32 0.0, %v129
    %v131 = vpop.f32.mrb[0].mxu0
    %132 = vmatprep.mubr.f32.mxu0 0.0
    %133 = vmatmul.mubr.f32.gmra.mrb[0].mxu0 %v46
    %v134 = vpop.f32.mrb[0].mxu0
    %v135 = vadd.f32 0.0, %v134
    %v136 = vpop.f32.mrb[0].mxu0
    %137 = vdwg.mxu0
    %138 = vst [vmem:[#allocation5] sm:$0xff] %v130
    %139 = vst [vmem:[#allocation5 + $0x8] sm:$0xff] %v135
    %v140 = vld [vmem:[%s1] sm:$0xff]
    %v141 = vld [vmem:[%s1 + $0x8] sm:$0xff]
    %142 = vmax.xlane.f32.xlu0 %v130
    %v143 = vpop.xlane.xlu0 %142
    %144 = vmax.xlane.f32.xlu0 %v135
    %v145 = vpop.xlane.xlu0 %144
    %v146 = vsub.f32 %v130, %v143
    %v147 = vsub.f32 %v135, %v145
    %v148 = vmul.f32 %v146, 1.442695
    %v149 = vpow.pop %v148
    %v150 = vmul.f32 %v147, 1.442695
    %v151 = vpow.pop %v150
    %152 = vadd.xlane.f32.xlu0 %v149
    %v153 = vpop.xlane.xlu0 %152
    %154 = vadd.xlane.f32.xlu0 %v151
    %v155 = vpop.xlane.xlu0 %154
    %v156 = vlog2.pop %v153
    %v157 = vmul.f32 %v156, 0.6931472
    %v158 = vlog2.pop %v155
    %v159 = vmul.f32 %v158, 0.6931472
    %v160 = vadd.f32 %v143, %v157
    %v161 = vadd.f32 %v145, %v159
    %162 = vset.pattern.permute.xlu0 0
    %163 = vperm.xlu0 %162, %v140
    %v164 = vpop.permute.xlu0 %163
    %165 = vset.pattern.permute.xlu0 0
    %166 = vperm.xlu0 %165, %v141
    %v167 = vpop.permute.xlu0 %166
    %vm168 = vcmp.eq.s32.totalorder %v32, %v164
    %vm169 = vcmp.eq.s32.totalorder %v32, %v167
    %v170 = vsel %vm168, %v130, 0.0
    %v171 = vsel %vm169, %v135, 0.0
    %172 = vadd.xlane.f32.xlu0 %v170
    %v173 = vpop.xlane.xlu0 %172
    %174 = vadd.xlane.f32.xlu0 %v171
    %v175 = vpop.xlane.xlu0 %174
    %vm176 = vcmp.ge.s32.totalorder %v140, 0
    %vm177 = vcmp.ge.s32.totalorder %v141, 0
    %v178 = vsub.f32 %v160, %v173
    %v179 = vsub.f32 %v161, %v175
    %v180 = vsel %vm176, %v178, 0.0
    %v181 = vsel %vm177, %v179, 0.0
    %vm182 = vcmask 7168
    %183 = vst.msk [vmem:[%s4] sm:$0xff] %vm182, %v180
    %184 = vst.msk [vmem:[%s4 + $0x8] sm:$0xff] %vm182, %v181
    // Predicated region
    $region18: #{_logits_loss_pallas.1} parent=1 // pred_check
      _
    $region19: #{_logits_loss_pallas.1} parent=1 // pred_check_branch
      %186 = sbr.rel (0) target = $region21
    $region20: #{_logits_loss_pallas.1} parent=1 // pred_region
      %s188 = ssub.s32 256, 256
      %189 = vsyncadd [#allocation4], %s188
      %s190 = sshll.u32 [#allocation5], 4
      %s191 = int_to_ptr.vmem [resolvable:$true] %s190
      %196 = dma.vmem_to_hbm [thread:$0]  %s191, 256, %s3, [#allocation4], 128, 128, 8
    $region21: #{_logits_loss_pallas.1} parent=1 // pred_fallthru
      _
    // Predicated region
    $region22: #{_logits_loss_pallas.1} parent=1 // pred_check
      _
    $region23: #{_logits_loss_pallas.1} parent=1 // pred_check_branch
      %198 = sbr.rel (0) target = $region25
    $region24: #{_logits_loss_pallas.1} parent=1 // pred_region
      _
    $region25: #{_logits_loss_pallas.1} parent=1 // pred_fallthru
      _
    // Predicated region
    $region26: #{_logits_loss_pallas.1} parent=1 // pred_check
      _
    $region27: #{_logits_loss_pallas.1} parent=1 // pred_check_branch
      %200 = sbr.rel (0) target = $region29
    $region28: #{_logits_loss_pallas.1} parent=1 // pred_region
      %201 = dma.done [#allocation4], 256
    $region29: #{_logits_loss_pallas.1} parent=1 // pred_fallthru
      _
    // Predicated region
    $region30: #{_logits_loss_pallas.1} parent=1 // pred_check
      _
    $region31: #{_logits_loss_pallas.1} parent=1 // pred_check_branch
      %203 = sbr.rel (0) target = $region33
    $region32: #{_logits_loss_pallas.1} parent=1 // pred_region
      _
    $region33: #{_logits_loss_pallas.1} parent=1 // pred_fallthru
      _
    %204 = vsyncpa [#allocation3], 1
    %205 = vsyncpa [#allocation4], 1

</llo_original>
